<compile_context>
chip_gen: v5e
topology: v5e:2x2
jax: 0.10.0
libtpu: 0.0.40
codegen_flags: <defaults>
</compile_context>

<pallas_src>
import jax
import jax.numpy as jnp
from jax.experimental import pallas as pl
from jax.experimental.pallas import tpu as pltpu


def _identity_kernel(x_ref, o_ref):
    # Straight VMEM tile copy.
    o_ref[...] = x_ref[...]


def _target_block_bytes():
    """Per-block byte budget, tuned per TPU generation (trace-time query)."""
    try:
        info = pltpu.get_tpu_info()
        vmem = getattr(info, "vmem_capacity_bytes", None)
        # v7x has 64 MiB VMEM per TC (v5e/v6e have 128 MiB): use 4 MiB blocks
        # there so the fixed per-grid-step overhead stays small relative to a
        # single block's DMA time at ~3.2 TB/s.
        if vmem is not None and vmem <= 64 * 1024 * 1024:
            return 4 * 1024 * 1024
    except Exception:
        pass
    # v5e/v6e: 2 MiB blocks -> >=85% of HBM roofline, and 2 arrays x 2 bufs
    # x 2 MiB = 8 MiB fits v5e's 16 MiB scoped-VMEM default with headroom.
    return 2 * 1024 * 1024


def _identity_copy_impl(x):
    """Pallas identity: returns a fresh tensor equal to x (same shape/dtype)."""
    orig_shape = x.shape
    dtype = x.dtype
    n = x.size
    if n == 0:
        return x  # nothing to copy

    itemsize = jnp.dtype(dtype).itemsize
    packing = max(1, 4 // itemsize)   # 1 for f32, 2 for bf16, 4 for int8/fp8
    sublane = 8 * packing             # full packed sublane tile per dtype
    target_elems = max(1, _target_block_bytes() // itemsize)

    # Build a lane-dense 2-D view. Under jit a contiguous reshape is a bitcast,
    # so no extra HBM traffic is introduced here.
    if n % 128 == 0:
        # Divisible case: wide lanes, tile along the row (sublane) axis.
        lane = 128
        for cand in (1024, 512, 256):   # wider lanes -> longer unmasked bursts
            if n % cand == 0 and (n // cand) >= sublane:
                lane = cand
                break
        rows = n // lane
        tile_rows = min(rows, max(sublane, target_elems // lane))
        if tile_rows < rows:
            # Keep packed sublanes unmasked for sub-32-bit dtypes.
            tile_rows = max(sublane, (tile_rows // sublane) * sublane)
        block = (tile_rows, lane)
        grid = (pl.cdiv(rows, tile_rows),)          # Pallas masks the tail
        index_map = lambda i: (i, 0)
        view_shape = (rows, lane)
    else:
        # Ragged total: flatten to (8, n//8) or (1, n) and tile the LANE axis
        # in multiples of 128 so every block except the masked tail uses
        # full-lane unmasked stores, and no block can exceed the VMEM budget.
        rows = 8 if n % 8 == 0 else 1
        cols = n // rows
        budget_cols = max(128, (target_elems // rows) // 128 * 128)
        if cols <= budget_cols:
            tile_cols = cols            # single full-extent block (allowed)
        else:
            tile_cols = budget_cols     # multiple of 128, < cols
        block = (rows, tile_cols)
        grid = (pl.cdiv(cols, tile_cols),)          # Pallas masks the tail
        index_map = lambda i: (0, i)
        view_shape = (rows, cols)

    x2d = x.reshape(view_shape)

    out2d = pl.pallas_call(
        _identity_kernel,
        out_shape=jax.ShapeDtypeStruct(view_shape, dtype),
        grid_spec=pltpu.PrefetchScalarGridSpec(
            num_scalar_prefetch=0,
            grid=grid,
            in_specs=[pl.BlockSpec(block, index_map)],
            out_specs=pl.BlockSpec(block, index_map),
        ),
        compiler_params=pltpu.CompilerParams(
            # "parallel" grid axes are sharded across both TensorCores on v7x
            # (megacore); no-op on v5e/v6e (single TC).
            dimension_semantics=("parallel",),
        ),
        cost_estimate=pl.CostEstimate(
            flops=0,
            transcendentals=0,
            bytes_accessed=2 * n * itemsize,
        ),
    )(x2d)

    return out2d.reshape(orig_shape)


# Default path: no donation, no aliasing -> exactly one HBM read + one write.
identity_forward = jax.jit(_identity_copy_impl)


def _identity_donated_impl(x):
    # With a donated input, the optimal identity is the input buffer itself:
    # zero HBM traffic (pure alias under jit). Use the Pallas copy path above
    # only when the caller still needs x afterwards.
    return x


# Donated fast path. CONTRACT: the caller must not use x after this call.
identity_forward_donated = jax.jit(_identity_donated_impl, donate_argnums=0)


if __name__ == "__main__":
    key = jax.random.PRNGKey(0)
    # Small NCHW input consistent with a typical conv-net feature map.
    x = jax.random.normal(key, (2, 4, 16, 16), dtype=jnp.float32)

    # Pallas copy path (caller keeps x).
    y = identity_forward(x)
    jax.block_until_ready(y)
    assert y.shape == x.shape and y.dtype == x.dtype
    assert bool(jnp.all(y == x))

    # Donated zero-copy path (x2 is consumed; compare against the original x).
    x2 = jnp.array(x)  # fresh buffer that we are allowed to donate
    y2 = identity_forward_donated(x2)
    jax.block_until_ready(y2)
    assert y2.shape == x.shape and y2.dtype == x.dtype
    assert bool(jnp.all(y2 == x))

    print("KERNEL_OK")
</pallas_src>

<mosaic_0001>
module attributes {stable_mosaic.version = 11 : i64} {
  func.func @_identity_kernel(%arg0: i32, %arg1: memref<8x256xf32, #tpu.memory_space<vmem>>, %arg2: memref<8x256xf32, #tpu.memory_space<vmem>>) attributes {dimension_semantics = [#tpu.dimension_semantics<parallel>], iteration_bounds = array<i64: 1>, scalar_prefetch = 0 : i64, scratch_operands = 0 : i64, tpu.core_type = #tpu.core_type<tc>, window_params = [{transform_indices = @transform_0, window_bounds = array<i64: 8, 256>}, {transform_indices = @transform_1, window_bounds = array<i64: 8, 256>}]} {
    %c0 = arith.constant 0 : index
    %c0_0 = arith.constant 0 : index
    %0 = vector.load %arg1[%c0, %c0_0] : memref<8x256xf32, #tpu.memory_space<vmem>>, vector<8x256xf32>
    %c0_1 = arith.constant 0 : index
    %c0_2 = arith.constant 0 : index
    %1 = vector.load %arg2[%c0_1, %c0_2] : memref<8x256xf32, #tpu.memory_space<vmem>>, vector<8x256xf32>
    tpu.vector_store %arg2[%c0_1, %c0_2], %0 {strides = array<i32>} : memref<8x256xf32, #tpu.memory_space<vmem>>, vector<8x256xf32>,
    return
  }
  func.func @transform_0(%arg0: i32) -> (i32, i32) {
    %c0_i32 = arith.constant 0 : i32
    %c0_i32_0 = arith.constant 0 : i32
    return %arg0, %c0_i32 : i32, i32
  }
  func.func @transform_1(%arg0: i32) -> (i32, i32) {
    %c0_i32 = arith.constant 0 : i32
    %c0_i32_0 = arith.constant 0 : i32
    return %arg0, %c0_i32 : i32, i32
  }
}

</mosaic_0001>

<llo_original>
// kernel: _identity_copy_impl.1
$region0: #{_identity_copy_impl.1}
  #allocation0 [shape = 'u32[]', space=smem, size = 0x4, offset = 0x4, fixed_abs, tag = 'smem constant byte address 0x4 - core index']
  #allocation1 [shape = 'u32[72,128]{1,0:T(1,128)}', space=vmem, size = 0x9000, scoped, tag = 'internal scratch']
  %s0 = inlined_call_operand.vmem [shape: f32[8,256], index: 0, kind: input, shape index: {}]
  %s1 = inlined_call_operand.vmem [shape: f32[8,256], index: 1, kind: output, shape index: {}]
  %s2 = sld [smem:[#allocation0]]
  $region14: #{_identity_copy_impl.1} parent=0
    _
  %s4 = ssub.s32 1, %s2
  %s5 = scalar_select 0, %s4, %s2
  // Predicated region
  $region2: #{_identity_copy_impl.1} parent=0 // pred_check
    _
  $region3: #{_identity_copy_impl.1} parent=0 // pred_check_branch
    %7 = sbr.rel (0) target = $region5
  $region4: #{_identity_copy_impl.1} parent=0 // pred_region
    _
  $region5: #{_identity_copy_impl.1} parent=0 // pred_fallthru
    _
  %v8 = vld [vmem:[%s0] sm:$0xff]
  %v9 = vld [vmem:[%s0 + $0x8] sm:$0xff]
  %10 = vst [vmem:[%s1] sm:$0xff] %v8
  %11 = vst [vmem:[%s1 + $0x8] sm:$0xff] %v9
  // Predicated region
  $region6: #{_identity_copy_impl.1} parent=0 // pred_check
    _
  $region7: #{_identity_copy_impl.1} parent=0 // pred_check_branch
    %13 = sbr.rel (0) target = $region9
  $region8: #{_identity_copy_impl.1} parent=0 // pred_region
    _
  $region9: #{_identity_copy_impl.1} parent=0 // pred_fallthru
    _
  // Predicated region
  $region10: #{_identity_copy_impl.1} parent=0 // pred_check
    _
  $region11: #{_identity_copy_impl.1} parent=0 // pred_check_branch
    %15 = sbr.rel (0) target = $region13
  $region12: #{_identity_copy_impl.1} parent=0 // pred_region
    _
  $region13: #{_identity_copy_impl.1} parent=0 // pred_fallthru
    _

</llo_original>
